<compile_context>
chip_gen: v7x
topology: tpu7x:2x2x1
jax: 0.10.0
libtpu: 0.0.40
codegen_flags: <defaults>
</compile_context>

<pallas_src>
import jax
import jax.numpy as jnp
from jax.experimental import pallas as pl
from jax.experimental.pallas import tpu as pltpu

HIDDEN_PAD = 128      # hidden width padded 64 -> 128 (full lane width)
OUT_PAD = 128         # output lanes padded to 128 (lane-dense stores)
SUBLANE_BF16 = 16     # bf16 sublane packing granularity


def _dqn_mlp_kernel(x_ref,
                    w1_ref, b1_ref,
                    w2_ref, b2_ref,
                    w3_ref, b3_ref,
                    w4_ref, b4_ref,
                    out_ref):
    """Fused 4-layer MLP on one batch tile: bf16 matmuls, f32 accumulation."""
    h = jnp.dot(x_ref[...], w1_ref[...],
                preferred_element_type=jnp.float32) + b1_ref[...]
    h = jnp.maximum(h, 0.0).astype(jnp.bfloat16)

    h = jnp.dot(h, w2_ref[...],
                preferred_element_type=jnp.float32) + b2_ref[...]
    h = jnp.maximum(h, 0.0).astype(jnp.bfloat16)

    h = jnp.dot(h, w3_ref[...],
                preferred_element_type=jnp.float32) + b3_ref[...]
    h = jnp.maximum(h, 0.0).astype(jnp.bfloat16)

    y = jnp.dot(h, w4_ref[...],
                preferred_element_type=jnp.float32) + b4_ref[...]
    out_ref[...] = y  # full 128-lane f32 store


def init_dqn_params(key, state_dim, action_dim, hidden=64):
    """nn.Linear-style init. Weights stored (in, out) = transpose of PyTorch."""
    dims = [(state_dim, hidden), (hidden, hidden),
            (hidden, hidden), (hidden, action_dim)]
    params = {}
    for i, (fan_in, fan_out) in enumerate(dims, start=1):
        key, kw, kb = jax.random.split(key, 3)
        bound = 1.0 / jnp.sqrt(jnp.float32(fan_in))
        params[f"w{i}"] = jax.random.uniform(
            kw, (fan_in, fan_out), jnp.float32, -bound, bound)
        params[f"b{i}"] = jax.random.uniform(
            kb, (1, fan_out), jnp.float32, -bound, bound)
    return params


def prepare_params(params):
    """One-time prep: zero-pad hidden/out to 128 lanes, cast weights to bf16.

    Zero padding preserves semantics: padded hidden units get weight 0 and
    bias 0, so they stay 0 through every ReLU and contribute nothing.
    Biases stay float32 (they are added to the f32 accumulator).
    """
    def pad_to(a, rows, cols):
        return jnp.pad(a, ((0, rows - a.shape[0]), (0, cols - a.shape[1])))

    state_dim = params["w1"].shape[0]
    prepared = {
        "w1": pad_to(params["w1"], state_dim, HIDDEN_PAD).astype(jnp.bfloat16),
        "b1": pad_to(params["b1"], 1, HIDDEN_PAD),
        "w2": pad_to(params["w2"], HIDDEN_PAD, HIDDEN_PAD).astype(jnp.bfloat16),
        "b2": pad_to(params["b2"], 1, HIDDEN_PAD),
        "w3": pad_to(params["w3"], HIDDEN_PAD, HIDDEN_PAD).astype(jnp.bfloat16),
        "b3": pad_to(params["b3"], 1, HIDDEN_PAD),
        "w4": pad_to(params["w4"], HIDDEN_PAD, OUT_PAD).astype(jnp.bfloat16),
        "b4": pad_to(params["b4"], 1, OUT_PAD),
    }
    return prepared


def dqn_forward(x, prepared, action_dim, tile_b=256):
    """DQN forward. x: (batch, state_dim) float32. Returns (batch, action_dim) f32."""
    batch, state_dim = x.shape

    # Shrink tile for tiny batches; keep it a multiple of 16 (bf16 sublanes).
    rounded_batch = ((batch + SUBLANE_BF16 - 1) // SUBLANE_BF16) * SUBLANE_BF16
    tile_b = max(SUBLANE_BF16, min(tile_b, rounded_batch))
    padded_batch = pl.cdiv(batch, tile_b) * tile_b

    xb = x.astype(jnp.bfloat16)            # cast once, halves activation DMA
    if padded_batch != batch:
        xb = jnp.pad(xb, ((0, padded_batch - batch), (0, 0)))

    resident = lambda i: (0, 0)            # weights/biases stay put across steps
    in_specs = [
        pl.BlockSpec((tile_b, state_dim), lambda i: (i, 0)),       # x tile
        pl.BlockSpec((state_dim, HIDDEN_PAD), resident),           # w1
        pl.BlockSpec((1, HIDDEN_PAD), resident),                   # b1
        pl.BlockSpec((HIDDEN_PAD, HIDDEN_PAD), resident),          # w2
        pl.BlockSpec((1, HIDDEN_PAD), resident),                   # b2
        pl.BlockSpec((HIDDEN_PAD, HIDDEN_PAD), resident),          # w3
        pl.BlockSpec((1, HIDDEN_PAD), resident),                   # b3
        pl.BlockSpec((HIDDEN_PAD, OUT_PAD), resident),             # w4
        pl.BlockSpec((1, OUT_PAD), resident),                      # b4
    ]
    out_spec = pl.BlockSpec((tile_b, OUT_PAD), lambda i: (i, 0))

    out = pl.pallas_call(
        _dqn_mlp_kernel,
        out_shape=jax.ShapeDtypeStruct((padded_batch, OUT_PAD), jnp.float32),
        grid=(padded_batch // tile_b,),
        in_specs=in_specs,
        out_specs=out_spec,
        compiler_params=pltpu.CompilerParams(
            dimension_semantics=("parallel",)),   # shard batch over v7x's 2 TCs
    )(xb,
      prepared["w1"], prepared["b1"],
      prepared["w2"], prepared["b2"],
      prepared["w3"], prepared["b3"],
      prepared["w4"], prepared["b4"])

    return out[:batch, :action_dim]


def dqn_forward_ref(x, prepared, action_dim):
    """Pure-JAX reference mirroring the kernel's bf16/f32 numerics."""
    h = x.astype(jnp.bfloat16)
    h = jnp.maximum(jnp.dot(h, prepared["w1"],
                            preferred_element_type=jnp.float32) + prepared["b1"], 0.0)
    h = h.astype(jnp.bfloat16)
    h = jnp.maximum(jnp.dot(h, prepared["w2"],
                            preferred_element_type=jnp.float32) + prepared["b2"], 0.0)
    h = h.astype(jnp.bfloat16)
    h = jnp.maximum(jnp.dot(h, prepared["w3"],
                            preferred_element_type=jnp.float32) + prepared["b3"], 0.0)
    h = h.astype(jnp.bfloat16)
    y = jnp.dot(h, prepared["w4"],
                preferred_element_type=jnp.float32) + prepared["b4"]
    return y[:, :action_dim]


if __name__ == "__main__":
    key = jax.random.PRNGKey(0)
    batch = 8
    state_dim = 16      # state_dimension
    action_dim = 8      # action_dimension

    key, kx, kp = jax.random.split(key, 3)
    x = jax.random.normal(kx, (batch, state_dim), jnp.float32)

    params = init_dqn_params(kp, state_dim, action_dim)
    prepared = prepare_params(params)

    out = dqn_forward(x, prepared, action_dim)
    out = jax.block_until_ready(out)

    ref = dqn_forward_ref(x, prepared, action_dim)
    assert out.shape == (batch, action_dim), out.shape
    assert jnp.allclose(out, ref, atol=1e-3, rtol=1e-3), \
        f"max abs err = {jnp.max(jnp.abs(out - ref))}"

    print("KERNEL_OK")
</pallas_src>

<mosaic_0001>
module attributes {stable_mosaic.version = 11 : i64} {
  func.func @_dqn_mlp_kernel(%arg0: i32, %arg1: memref<16x16xbf16, #tpu.memory_space<vmem>>, %arg2: memref<16x128xbf16, #tpu.memory_space<vmem>>, %arg3: memref<1x128xf32, #tpu.memory_space<vmem>>, %arg4: memref<128x128xbf16, #tpu.memory_space<vmem>>, %arg5: memref<1x128xf32, #tpu.memory_space<vmem>>, %arg6: memref<128x128xbf16, #tpu.memory_space<vmem>>, %arg7: memref<1x128xf32, #tpu.memory_space<vmem>>, %arg8: memref<128x128xbf16, #tpu.memory_space<vmem>>, %arg9: memref<1x128xf32, #tpu.memory_space<vmem>>, %arg10: memref<16x128xf32, #tpu.memory_space<vmem>>) attributes {dimension_semantics = [#tpu.dimension_semantics<parallel>], iteration_bounds = array<i64: 1>, scalar_prefetch = 0 : i64, scratch_operands = 0 : i64, tpu.core_type = #tpu.core_type<tc>, window_params = [{transform_indices = @transform_0, window_bounds = array<i64: 16, 16>}, {pipeline_mode = #tpu.pipeline_mode<synchronous>, transform_indices = @transform_1, window_bounds = array<i64: 16, 128>}, {pipeline_mode = #tpu.pipeline_mode<synchronous>, transform_indices = @transform_2, window_bounds = array<i64: 1, 128>}, {pipeline_mode = #tpu.pipeline_mode<synchronous>, transform_indices = @transform_3, window_bounds = array<i64: 128, 128>}, {pipeline_mode = #tpu.pipeline_mode<synchronous>, transform_indices = @transform_4, window_bounds = array<i64: 1, 128>}, {pipeline_mode = #tpu.pipeline_mode<synchronous>, transform_indices = @transform_5, window_bounds = array<i64: 128, 128>}, {pipeline_mode = #tpu.pipeline_mode<synchronous>, transform_indices = @transform_6, window_bounds = array<i64: 1, 128>}, {pipeline_mode = #tpu.pipeline_mode<synchronous>, transform_indices = @transform_7, window_bounds = array<i64: 128, 128>}, {pipeline_mode = #tpu.pipeline_mode<synchronous>, transform_indices = @transform_8, window_bounds = array<i64: 1, 128>}, {transform_indices = @transform_9, window_bounds = array<i64: 16, 128>}]} {
    %c0 = arith.constant 0 : index
    %c0_0 = arith.constant 0 : index
    %0 = vector.load %arg1[%c0, %c0_0] : memref<16x16xbf16, #tpu.memory_space<vmem>>, vector<16x16xbf16>
    %c0_1 = arith.constant 0 : index
    %c0_2 = arith.constant 0 : index
    %1 = vector.load %arg2[%c0_1, %c0_2] : memref<16x128xbf16, #tpu.memory_space<vmem>>, vector<16x128xbf16>
    %cst = arith.constant dense<0.000000e+00> : vector<16x128xf32>
    %2 = tpu.matmul %0, %1, %cst {dimension_numbers = #tpu.dot_dimension_numbers<[1], [0], [0], [1], [0, 0, 1, 1], [], []>} : vector<16x16xbf16>, vector<16x128xbf16>, vector<16x128xf32> -> vector<16x128xf32>
    %c0_3 = arith.constant 0 : index
    %c0_4 = arith.constant 0 : index
    %3 = vector.load %arg3[%c0_3, %c0_4] : memref<1x128xf32, #tpu.memory_space<vmem>>, vector<1x128xf32>
    %4 = vector.broadcast %3 : vector<1x128xf32> to vector<16x128xf32>
    %5 = arith.addf %2, %4 : vector<16x128xf32>
    %cst_5 = arith.constant 0.000000e+00 : f32
    %6 = vector.broadcast %cst_5 : f32 to vector<16x128xf32>
    %7 = arith.maximumf %5, %6 : vector<16x128xf32>
    %8 = arith.truncf %7 : vector<16x128xf32> to vector<16x128xbf16>
    %c0_6 = arith.constant 0 : index
    %c0_7 = arith.constant 0 : index
    %9 = vector.load %arg4[%c0_6, %c0_7] : memref<128x128xbf16, #tpu.memory_space<vmem>>, vector<128x128xbf16>
    %cst_8 = arith.constant dense<0.000000e+00> : vector<16x128xf32>
    %10 = tpu.matmul %8, %9, %cst_8 {dimension_numbers = #tpu.dot_dimension_numbers<[1], [0], [0], [1], [0, 0, 1, 1], [], []>} : vector<16x128xbf16>, vector<128x128xbf16>, vector<16x128xf32> -> vector<16x128xf32>
    %c0_9 = arith.constant 0 : index
    %c0_10 = arith.constant 0 : index
    %11 = vector.load %arg5[%c0_9, %c0_10] : memref<1x128xf32, #tpu.memory_space<vmem>>, vector<1x128xf32>
    %12 = vector.broadcast %11 : vector<1x128xf32> to vector<16x128xf32>
    %13 = arith.addf %10, %12 : vector<16x128xf32>
    %cst_11 = arith.constant 0.000000e+00 : f32
    %14 = vector.broadcast %cst_11 : f32 to vector<16x128xf32>
    %15 = arith.maximumf %13, %14 : vector<16x128xf32>
    %16 = arith.truncf %15 : vector<16x128xf32> to vector<16x128xbf16>
    %c0_12 = arith.constant 0 : index
    %c0_13 = arith.constant 0 : index
    %17 = vector.load %arg6[%c0_12, %c0_13] : memref<128x128xbf16, #tpu.memory_space<vmem>>, vector<128x128xbf16>
    %cst_14 = arith.constant dense<0.000000e+00> : vector<16x128xf32>
    %18 = tpu.matmul %16, %17, %cst_14 {dimension_numbers = #tpu.dot_dimension_numbers<[1], [0], [0], [1], [0, 0, 1, 1], [], []>} : vector<16x128xbf16>, vector<128x128xbf16>, vector<16x128xf32> -> vector<16x128xf32>
    %c0_15 = arith.constant 0 : index
    %c0_16 = arith.constant 0 : index
    %19 = vector.load %arg7[%c0_15, %c0_16] : memref<1x128xf32, #tpu.memory_space<vmem>>, vector<1x128xf32>
    %20 = vector.broadcast %19 : vector<1x128xf32> to vector<16x128xf32>
    %21 = arith.addf %18, %20 : vector<16x128xf32>
    %cst_17 = arith.constant 0.000000e+00 : f32
    %22 = vector.broadcast %cst_17 : f32 to vector<16x128xf32>
    %23 = arith.maximumf %21, %22 : vector<16x128xf32>
    %24 = arith.truncf %23 : vector<16x128xf32> to vector<16x128xbf16>
    %c0_18 = arith.constant 0 : index
    %c0_19 = arith.constant 0 : index
    %25 = vector.load %arg8[%c0_18, %c0_19] : memref<128x128xbf16, #tpu.memory_space<vmem>>, vector<128x128xbf16>
    %cst_20 = arith.constant dense<0.000000e+00> : vector<16x128xf32>
    %26 = tpu.matmul %24, %25, %cst_20 {dimension_numbers = #tpu.dot_dimension_numbers<[1], [0], [0], [1], [0, 0, 1, 1], [], []>} : vector<16x128xbf16>, vector<128x128xbf16>, vector<16x128xf32> -> vector<16x128xf32>
    %c0_21 = arith.constant 0 : index
    %c0_22 = arith.constant 0 : index
    %27 = vector.load %arg9[%c0_21, %c0_22] : memref<1x128xf32, #tpu.memory_space<vmem>>, vector<1x128xf32>
    %28 = vector.broadcast %27 : vector<1x128xf32> to vector<16x128xf32>
    %29 = arith.addf %26, %28 : vector<16x128xf32>
    %c0_23 = arith.constant 0 : index
    %c0_24 = arith.constant 0 : index
    %30 = vector.load %arg10[%c0_23, %c0_24] : memref<16x128xf32, #tpu.memory_space<vmem>>, vector<16x128xf32>
    tpu.vector_store %arg10[%c0_23, %c0_24], %29 {strides = array<i32>} : memref<16x128xf32, #tpu.memory_space<vmem>>, vector<16x128xf32>,
    return
  }
  func.func @transform_0(%arg0: i32) -> (i32, i32) {
    %c0_i32 = arith.constant 0 : i32
    %c0_i32_0 = arith.constant 0 : i32
    return %arg0, %c0_i32 : i32, i32
  }
  func.func @transform_1(%arg0: i32) -> (i32, i32) {
    %c0_i32 = arith.constant 0 : i32
    %c0_i32_0 = arith.constant 0 : i32
    %c0_i32_1 = arith.constant 0 : i32
    return %c0_i32, %c0_i32_0 : i32, i32
  }
  func.func @transform_2(%arg0: i32) -> (i32, i32) {
    %c0_i32 = arith.constant 0 : i32
    %c0_i32_0 = arith.constant 0 : i32
    %c0_i32_1 = arith.constant 0 : i32
    return %c0_i32, %c0_i32_0 : i32, i32
  }
  func.func @transform_3(%arg0: i32) -> (i32, i32) {
    %c0_i32 = arith.constant 0 : i32
    %c0_i32_0 = arith.constant 0 : i32
    %c0_i32_1 = arith.constant 0 : i32
    return %c0_i32, %c0_i32_0 : i32, i32
  }
  func.func @transform_4(%arg0: i32) -> (i32, i32) {
    %c0_i32 = arith.constant 0 : i32
    %c0_i32_0 = arith.constant 0 : i32
    %c0_i32_1 = arith.constant 0 : i32
    return %c0_i32, %c0_i32_0 : i32, i32
  }
  func.func @transform_5(%arg0: i32) -> (i32, i32) {
    %c0_i32 = arith.constant 0 : i32
    %c0_i32_0 = arith.constant 0 : i32
    %c0_i32_1 = arith.constant 0 : i32
    return %c0_i32, %c0_i32_0 : i32, i32
  }
  func.func @transform_6(%arg0: i32) -> (i32, i32) {
    %c0_i32 = arith.constant 0 : i32
    %c0_i32_0 = arith.constant 0 : i32
    %c0_i32_1 = arith.constant 0 : i32
    return %c0_i32, %c0_i32_0 : i32, i32
  }
  func.func @transform_7(%arg0: i32) -> (i32, i32) {
    %c0_i32 = arith.constant 0 : i32
    %c0_i32_0 = arith.constant 0 : i32
    %c0_i32_1 = arith.constant 0 : i32
    return %c0_i32, %c0_i32_0 : i32, i32
  }
  func.func @transform_8(%arg0: i32) -> (i32, i32) {
    %c0_i32 = arith.constant 0 : i32
    %c0_i32_0 = arith.constant 0 : i32
    %c0_i32_1 = arith.constant 0 : i32
    return %c0_i32, %c0_i32_0 : i32, i32
  }
  func.func @transform_9(%arg0: i32) -> (i32, i32) {
    %c0_i32 = arith.constant 0 : i32
    %c0_i32_0 = arith.constant 0 : i32
    return %arg0, %c0_i32 : i32, i32
  }
}

</mosaic_0001>

<llo_original>
// kernel: tpu_custom_call.1
$region0: #{tpu_custom_call.1}
  #allocation0 [shape = 'u32[]', space=smem, size = 0x4, offset = 0x4, fixed_abs, tag = 'smem constant byte address 0x4 - core index']
  #allocation1 [shape = 'u32[144,128]{1,0:T(1,128)}', space=vmem, size = 0x12000, scoped, tag = 'internal scratch']
  %s0 = inlined_call_operand.hbm [shape: bf16[16,16], index: 0, kind: input, shape index: {}]
  %s1 = inlined_call_operand.hbm [shape: bf16[16,128], index: 1, kind: input, shape index: {}]
  %s2 = inlined_call_operand.vmem [shape: f32[1,128], index: 2, kind: input, shape index: {}]
  %s3 = inlined_call_operand.hbm [shape: bf16[128,128], index: 3, kind: input, shape index: {}]
  %s4 = inlined_call_operand.vmem [shape: f32[1,128], index: 4, kind: input, shape index: {}]
  %s5 = inlined_call_operand.hbm [shape: bf16[128,128], index: 5, kind: input, shape index: {}]
  %s6 = inlined_call_operand.vmem [shape: f32[1,128], index: 6, kind: input, shape index: {}]
  %s7 = inlined_call_operand.hbm [shape: bf16[128,128], index: 7, kind: input, shape index: {}]
  %s8 = inlined_call_operand.vmem [shape: f32[1,128], index: 8, kind: input, shape index: {}]
  %s9 = inlined_call_operand.hbm [shape: f32[16,128], index: 9, kind: output, shape index: {}]
  %s10 = sld [smem:[#allocation0]]
  $region66: #{tpu_custom_call.1} parent=0
    _
  %s12 = ssub.s32 1, %s10
  %s13 = scalar_select 0, %s12, %s10
  $region1: #{tpu_custom_call.1} parent=0
    #allocation2 [shape = 'u8[4096]{0}', space=vmem, size = 0x1000, scoped, tag = 'input window, operand 0, single buffered']
    #allocation3 [shape = 's32[1]{0}', space=sflag, size = 0x4, scoped, tag = 'scoped memory for tpu_custom_call.1']
    #allocation4 [shape = 's32[1]{0}', space=sflag, size = 0x4, scoped, tag = 'scoped memory for tpu_custom_call.1']
    #allocation5 [shape = 'u8[4096]{0}', space=vmem, size = 0x1000, scoped, tag = 'input window, operand 1, single buffered']
    #allocation6 [shape = 's32[1]{0}', space=sflag, size = 0x4, scoped, tag = 'scoped memory for tpu_custom_call.1']
    #allocation7 [shape = 'u8[32768]{0}', space=vmem, size = 0x8000, scoped, tag = 'input window, operand 3, single buffered']
    #allocation8 [shape = 'u8[32768]{0}', space=vmem, size = 0x8000, scoped, tag = 'input window, operand 5, single buffered']
    #allocation9 [shape = 's32[1]{0}', space=sflag, size = 0x4, scoped, tag = 'scoped memory for tpu_custom_call.1']
    #allocation10 [shape = 'u8[32768]{0}', space=vmem, size = 0x8000, scoped, tag = 'input window, operand 7, single buffered']
    #allocation11 [shape = 'u8[8192]{0}', space=vmem, size = 0x2000, scoped, tag = 'output window, operand 0, single buffered']
    %14 = vsyncpa [#allocation3], 0
    %15 = vsyncpa [#allocation6], 0
    %16 = vsyncpa [#allocation9], 0
    %17 = vsyncpa [#allocation4], 0
    // Predicated region
    $region2: #{tpu_custom_call.1} parent=1 // pred_check
      _
    $region3: #{tpu_custom_call.1} parent=1 // pred_check_branch
      %19 = sbr.rel (0) target = $region5
    $region4: #{tpu_custom_call.1} parent=1 // pred_region
      %s21 = ssub.s32 128, 128
      %22 = vsyncadd [#allocation3], %s21
      %s23 = sshll.u32 [#allocation2], 4
      %s24 = int_to_ptr.vmem [resolvable:$true] %s23
      %29 = dma.hbm_to_vmem [thread:$0]  %s0, 128, %s24, [#allocation3], 64, 64, 4
    $region5: #{tpu_custom_call.1} parent=1 // pred_fallthru
      _
    // Predicated region
    $region6: #{tpu_custom_call.1} parent=1 // pred_check
      _
    $region7: #{tpu_custom_call.1} parent=1 // pred_check_branch
      %31 = sbr.rel (0) target = $region9
    $region8: #{tpu_custom_call.1} parent=1 // pred_region
      %s33 = ssub.s32 128, 128
      %34 = vsyncadd [#allocation6], %s33
      %s35 = sshll.u32 [#allocation5], 4
      %s36 = int_to_ptr.vmem [resolvable:$true] %s35
      %41 = dma.hbm_to_vmem [thread:$0]  %s1, 128, %s36, [#allocation6], 64, 64, 4
    $region9: #{tpu_custom_call.1} parent=1 // pred_fallthru
      _
    // Predicated region
    $region10: #{tpu_custom_call.1} parent=1 // pred_check
      _
    $region11: #{tpu_custom_call.1} parent=1 // pred_check_branch
      %43 = sbr.rel (0) target = $region13
    $region12: #{tpu_custom_call.1} parent=1 // pred_region
      _
    $region13: #{tpu_custom_call.1} parent=1 // pred_fallthru
      _
    // Predicated region
    $region14: #{tpu_custom_call.1} parent=1 // pred_check
      _
    $region15: #{tpu_custom_call.1} parent=1 // pred_check_branch
      %45 = sbr.rel (0) target = $region17
    $region16: #{tpu_custom_call.1} parent=1 // pred_region
      %s47 = ssub.s32 1024, 1024
      %48 = vsyncadd [#allocation6], %s47
      %s49 = sshll.u32 [#allocation7], 4
      %s50 = int_to_ptr.vmem [resolvable:$true] %s49
      %55 = dma.hbm_to_vmem [thread:$0]  %s3, 1024, %s50, [#allocation6], 64, 64, 4
    $region17: #{tpu_custom_call.1} parent=1 // pred_fallthru
      _
    // Predicated region
    $region18: #{tpu_custom_call.1} parent=1 // pred_check
      _
    $region19: #{tpu_custom_call.1} parent=1 // pred_check_branch
      %57 = sbr.rel (0) target = $region21
    $region20: #{tpu_custom_call.1} parent=1 // pred_region
      _
    $region21: #{tpu_custom_call.1} parent=1 // pred_fallthru
      _
    // Predicated region
    $region22: #{tpu_custom_call.1} parent=1 // pred_check
      _
    $region23: #{tpu_custom_call.1} parent=1 // pred_check_branch
      %59 = sbr.rel (0) target = $region25
    $region24: #{tpu_custom_call.1} parent=1 // pred_region
      %s61 = ssub.s32 1024, 1024
      %62 = vsyncadd [#allocation9], %s61
      %s63 = sshll.u32 [#allocation8], 4
      %s64 = int_to_ptr.vmem [resolvable:$true] %s63
      %69 = dma.hbm_to_vmem [thread:$0]  %s5, 1024, %s64, [#allocation9], 64, 64, 4
    $region25: #{tpu_custom_call.1} parent=1 // pred_fallthru
      _
    // Predicated region
    $region26: #{tpu_custom_call.1} parent=1 // pred_check
      _
    $region27: #{tpu_custom_call.1} parent=1 // pred_check_branch
      %71 = sbr.rel (0) target = $region29
    $region28: #{tpu_custom_call.1} parent=1 // pred_region
      _
    $region29: #{tpu_custom_call.1} parent=1 // pred_fallthru
      _
    // Predicated region
    $region30: #{tpu_custom_call.1} parent=1 // pred_check
      _
    $region31: #{tpu_custom_call.1} parent=1 // pred_check_branch
      %73 = sbr.rel (0) target = $region33
    $region32: #{tpu_custom_call.1} parent=1 // pred_region
      %s75 = ssub.s32 1024, 1024
      %76 = vsyncadd [#allocation9], %s75
      %s77 = sshll.u32 [#allocation10], 4
      %s78 = int_to_ptr.vmem [resolvable:$true] %s77
      %83 = dma.hbm_to_vmem [thread:$0]  %s7, 1024, %s78, [#allocation9], 64, 64, 4
    $region33: #{tpu_custom_call.1} parent=1 // pred_fallthru
      _
    // Predicated region
    $region34: #{tpu_custom_call.1} parent=1 // pred_check
      _
    $region35: #{tpu_custom_call.1} parent=1 // pred_check_branch
      %85 = sbr.rel (0) target = $region37
    $region36: #{tpu_custom_call.1} parent=1 // pred_region
      _
    $region37: #{tpu_custom_call.1} parent=1 // pred_fallthru
      _
    // Predicated region
    $region38: #{tpu_custom_call.1} parent=1 // pred_check
      _
    $region39: #{tpu_custom_call.1} parent=1 // pred_check_branch
      %87 = sbr.rel (0) target = $region41
    $region40: #{tpu_custom_call.1} parent=1 // pred_region
      %88 = dma.done [#allocation3], 128
    $region41: #{tpu_custom_call.1} parent=1 // pred_fallthru
      _
    // Predicated region
    $region42: #{tpu_custom_call.1} parent=1 // pred_check
      _
    $region43: #{tpu_custom_call.1} parent=1 // pred_check_branch
      %90 = sbr.rel (0) target = $region45
    $region44: #{tpu_custom_call.1} parent=1 // pred_region
      %91 = dma.done [#allocation6], 128
    $region45: #{tpu_custom_call.1} parent=1 // pred_fallthru
      _
    // Predicated region
    $region46: #{tpu_custom_call.1} parent=1 // pred_check
      _
    $region47: #{tpu_custom_call.1} parent=1 // pred_check_branch
      %93 = sbr.rel (0) target = $region49
    $region48: #{tpu_custom_call.1} parent=1 // pred_region
      %94 = dma.done [#allocation6], 1024
    $region49: #{tpu_custom_call.1} parent=1 // pred_fallthru
      _
    // Predicated region
    $region50: #{tpu_custom_call.1} parent=1 // pred_check
      _
    $region51: #{tpu_custom_call.1} parent=1 // pred_check_branch
      %96 = sbr.rel (0) target = $region53
    $region52: #{tpu_custom_call.1} parent=1 // pred_region
      %97 = dma.done [#allocation9], 1024
    $region53: #{tpu_custom_call.1} parent=1 // pred_fallthru
      _
    // Predicated region
    $region54: #{tpu_custom_call.1} parent=1 // pred_check
      _
    $region55: #{tpu_custom_call.1} parent=1 // pred_check_branch
      %99 = sbr.rel (0) target = $region57
    $region56: #{tpu_custom_call.1} parent=1 // pred_region
      %100 = dma.done [#allocation9], 1024
    $region57: #{tpu_custom_call.1} parent=1 // pred_fallthru
      _
    %v102 = vld [vmem:[#allocation2] sm:$0xf]
    %v103 = vld [vmem:[#allocation2 + $0x4] sm:$0xf]
    %v104 = vld [vmem:[#allocation5] sm:$0xf]
    %v105 = vld [vmem:[#allocation5 + $0x4] sm:$0xf]
    %v106 = vld [vmem:[%s2] sm:$0x1]
    %v108 = vlaneseq
    %v109 = vshrl.u32 %v108, 7
    %v110 = vsub.s32 0, %v109
    %v111 = vrot.slane %v106, %v110
    %v115 = vunpack.c.l.b16 %v102
    %v116 = vunpack.c.l.b16 %v103
    %v117 = vpack.c.b16 %v116, %v115
    %v120 = vunpack.c.l.b16 %v104
    %v121 = vunpack.c.l.b16 %v105
    %v122 = vpack.c.b16 %v121, %v120
    %vm124 = vcmask 130048
    %v126 = vsel %vm124, %v117, 0
    %128 = vmatprep.subr.bf16.mxu0 0
    %129 = vmatpush1.bf16.msra.mxu0 %v122
    %130 = vmatprep.subr.bf16.mxu0 0
    %131 = vmatpush1.bf16.msra.mxu0 0
    %132 = vmatprep.subr.bf16.mxu0 0
    %133 = vmatpush1.bf16.msra.mxu0 0
    %134 = vmatprep.subr.bf16.mxu0 0
    %135 = vmatpush1.bf16.msra.mxu0 0
    %136 = vmatprep.subr.bf16.mxu0 0
    %137 = vmatpush1.bf16.msra.mxu0 0
    %138 = vmatprep.subr.bf16.mxu0 0
    %139 = vmatpush1.bf16.msra.mxu0 0
    %140 = vmatprep.subr.bf16.mxu0 0
    %141 = vmatpush1.bf16.msra.mxu0 0
    %142 = vmatprep.subr.bf16.mxu0 0
    %143 = vmatpush1.bf16.msra.mxu0 0
    %144 = vmatprep.subr.bf16.mxu0 0
    %145 = vmatpush1.bf16.msra.mxu0 0
    %146 = vmatprep.subr.bf16.mxu0 0
    %147 = vmatpush1.bf16.msra.mxu0 0
    %148 = vmatprep.subr.bf16.mxu0 0
    %149 = vmatpush1.bf16.msra.mxu0 0
    %150 = vmatprep.subr.bf16.mxu0 0
    %151 = vmatpush1.bf16.msra.mxu0 0
    %152 = vmatprep.subr.bf16.mxu0 0
    %153 = vmatpush1.bf16.msra.mxu0 0
    %154 = vmatprep.subr.bf16.mxu0 0
    %155 = vmatpush1.bf16.msra.mxu0 0
    %156 = vmatprep.subr.bf16.mxu0 0
    %157 = vmatpush1.bf16.msra.mxu0 0
    %158 = vmatprep.subr.bf16.mxu0 0
    %159 = vmatpush1.bf16.msra.mxu0 0
    %160 = vmatprep.mubr.bf16.mxu0 0
    %161 = vmatmul.mubr.bf16.gmra.mrb[0].mxu0 %v126
    %v162 = vpop.f32.mrb[0].mxu0
    %v163 = vadd.f32 %v111, %v162
    %v164 = vpop.f32.mrb[0].mxu0
    %v165 = vpop.f32.mrb[0].mxu0
    %v166 = vadd.f32 %v111, %v165
    %v167 = vpop.f32.mrb[0].mxu0
    %168 = vdwg.mxu0
    %v169 = vmax.f32 %v163, 0.0
    %v170 = vmax.f32 %v166, 0.0
    %v171 = vpack.c.bf16 %v170, %v169
    %v172 = vld [vmem:[#allocation7] sm:$0xf]
    %v173 = vld [vmem:[#allocation7 + $0x4] sm:$0xf]
    %v174 = vld [vmem:[#allocation7 + $0x8] sm:$0xf]
    %v175 = vld [vmem:[#allocation7 + $0xc] sm:$0xf]
    %v176 = vld [vmem:[#allocation7 + $0x10] sm:$0xf]
    %v177 = vld [vmem:[#allocation7 + $0x14] sm:$0xf]
    %v178 = vld [vmem:[#allocation7 + $0x18] sm:$0xf]
    %v179 = vld [vmem:[#allocation7 + $0x1c] sm:$0xf]
    %v180 = vld [vmem:[#allocation7 + $0x20] sm:$0xf]
    %v181 = vld [vmem:[#allocation7 + $0x24] sm:$0xf]
    %v182 = vld [vmem:[#allocation7 + $0x28] sm:$0xf]
    %v183 = vld [vmem:[#allocation7 + $0x2c] sm:$0xf]
    %v184 = vld [vmem:[#allocation7 + $0x30] sm:$0xf]
    %v185 = vld [vmem:[#allocation7 + $0x34] sm:$0xf]
    %v186 = vld [vmem:[#allocation7 + $0x38] sm:$0xf]
    %v187 = vld [vmem:[#allocation7 + $0x3c] sm:$0xf]
    %v188 = vld [vmem:[%s4] sm:$0x1]
    %v190 = vlaneseq
    %v191 = vshrl.u32 %v190, 7
    %v192 = vsub.s32 0, %v191
    %v193 = vrot.slane %v188, %v192
    %v211 = vunpack.c.l.b16 %v172
    %v212 = vunpack.c.l.b16 %v173
    %v213 = vunpack.c.l.b16 %v174
    %v214 = vunpack.c.l.b16 %v175
    %v215 = vunpack.c.l.b16 %v176
    %v216 = vunpack.c.l.b16 %v177
    %v217 = vunpack.c.l.b16 %v178
    %v218 = vunpack.c.l.b16 %v179
    %v219 = vunpack.c.l.b16 %v180
    %v220 = vunpack.c.l.b16 %v181
    %v221 = vunpack.c.l.b16 %v182
    %v222 = vunpack.c.l.b16 %v183
    %v223 = vunpack.c.l.b16 %v184
    %v224 = vunpack.c.l.b16 %v185
    %v225 = vunpack.c.l.b16 %v186
    %v226 = vunpack.c.l.b16 %v187
    %v227 = vpack.c.b16 %v212, %v211
    %v228 = vpack.c.b16 %v214, %v213
    %v229 = vpack.c.b16 %v216, %v215
    %v230 = vpack.c.b16 %v218, %v217
    %v231 = vpack.c.b16 %v220, %v219
    %v232 = vpack.c.b16 %v222, %v221
    %v233 = vpack.c.b16 %v224, %v223
    %v234 = vpack.c.b16 %v226, %v225
    %243 = vmatprep.subr.bf16.mxu0 0
    %244 = vmatpush1.bf16.msra.mxu0 %v227
    %245 = vmatprep.subr.bf16.mxu0 0
    %246 = vmatpush1.bf16.msra.mxu0 %v228
    %247 = vmatprep.subr.bf16.mxu0 0
    %248 = vmatpush1.bf16.msra.mxu0 %v229
    %249 = vmatprep.subr.bf16.mxu0 0
    %250 = vmatpush1.bf16.msra.mxu0 %v230
    %251 = vmatprep.subr.bf16.mxu0 0
    %252 = vmatpush1.bf16.msra.mxu0 %v231
    %253 = vmatprep.subr.bf16.mxu0 0
    %254 = vmatpush1.bf16.msra.mxu0 %v232
    %255 = vmatprep.subr.bf16.mxu0 0
    %256 = vmatpush1.bf16.msra.mxu0 %v233
    %257 = vmatprep.subr.bf16.mxu0 0
    %258 = vmatpush1.bf16.msra.mxu0 %v234
    %259 = vmatprep.subr.bf16.mxu0 0
    %260 = vmatpush1.bf16.msra.mxu0 0
    %261 = vmatprep.subr.bf16.mxu0 0
    %262 = vmatpush1.bf16.msra.mxu0 0
    %263 = vmatprep.subr.bf16.mxu0 0
    %264 = vmatpush1.bf16.msra.mxu0 0
    %265 = vmatprep.subr.bf16.mxu0 0
    %266 = vmatpush1.bf16.msra.mxu0 0
    %267 = vmatprep.subr.bf16.mxu0 0
    %268 = vmatpush1.bf16.msra.mxu0 0
    %269 = vmatprep.subr.bf16.mxu0 0
    %270 = vmatpush1.bf16.msra.mxu0 0
    %271 = vmatprep.subr.bf16.mxu0 0
    %272 = vmatpush1.bf16.msra.mxu0 0
    %273 = vmatprep.subr.bf16.mxu0 0
    %274 = vmatpush1.bf16.msra.mxu0 0
    %275 = vmatprep.mubr.bf16.mxu0 0
    %276 = vmatmul.mubr.bf16.gmra.mrb[0].mxu0 %v171
    %v277 = vpop.f32.mrb[0].mxu0
    %v278 = vadd.f32 %v193, %v277
    %v279 = vpop.f32.mrb[0].mxu0
    %v280 = vpop.f32.mrb[0].mxu0
    %v281 = vadd.f32 %v193, %v280
    %v282 = vpop.f32.mrb[0].mxu0
    %283 = vdwg.mxu0
    %v284 = vmax.f32 %v278, 0.0
    %v285 = vmax.f32 %v281, 0.0
    %v286 = vpack.c.bf16 %v285, %v284
    %v287 = vld [vmem:[#allocation8] sm:$0xf]
    %v288 = vld [vmem:[#allocation8 + $0x4] sm:$0xf]
    %v289 = vld [vmem:[#allocation8 + $0x8] sm:$0xf]
    %v290 = vld [vmem:[#allocation8 + $0xc] sm:$0xf]
    %v291 = vld [vmem:[#allocation8 + $0x10] sm:$0xf]
    %v292 = vld [vmem:[#allocation8 + $0x14] sm:$0xf]
    %v293 = vld [vmem:[#allocation8 + $0x18] sm:$0xf]
    %v294 = vld [vmem:[#allocation8 + $0x1c] sm:$0xf]
    %v295 = vld [vmem:[#allocation8 + $0x20] sm:$0xf]
    %v296 = vld [vmem:[#allocation8 + $0x24] sm:$0xf]
    %v297 = vld [vmem:[#allocation8 + $0x28] sm:$0xf]
    %v298 = vld [vmem:[#allocation8 + $0x2c] sm:$0xf]
    %v299 = vld [vmem:[#allocation8 + $0x30] sm:$0xf]
    %v300 = vld [vmem:[#allocation8 + $0x34] sm:$0xf]
    %v301 = vld [vmem:[#allocation8 + $0x38] sm:$0xf]
    %v302 = vld [vmem:[#allocation8 + $0x3c] sm:$0xf]
    %v303 = vld [vmem:[%s6] sm:$0x1]
    %v305 = vlaneseq
    %v306 = vshrl.u32 %v305, 7
    %v307 = vsub.s32 0, %v306
    %v308 = vrot.slane %v303, %v307
    %v326 = vunpack.c.l.b16 %v287
    %v327 = vunpack.c.l.b16 %v288
    %v328 = vunpack.c.l.b16 %v289
    %v329 = vunpack.c.l.b16 %v290
    %v330 = vunpack.c.l.b16 %v291
    %v331 = vunpack.c.l.b16 %v292
    %v332 = vunpack.c.l.b16 %v293
    %v333 = vunpack.c.l.b16 %v294
    %v334 = vunpack.c.l.b16 %v295
    %v335 = vunpack.c.l.b16 %v296
    %v336 = vunpack.c.l.b16 %v297
    %v337 = vunpack.c.l.b16 %v298
    %v338 = vunpack.c.l.b16 %v299
    %v339 = vunpack.c.l.b16 %v300
    %v340 = vunpack.c.l.b16 %v301
    %v341 = vunpack.c.l.b16 %v302
    %v342 = vpack.c.b16 %v327, %v326
    %v343 = vpack.c.b16 %v329, %v328
    %v344 = vpack.c.b16 %v331, %v330
    %v345 = vpack.c.b16 %v333, %v332
    %v346 = vpack.c.b16 %v335, %v334
    %v347 = vpack.c.b16 %v337, %v336
    %v348 = vpack.c.b16 %v339, %v338
    %v349 = vpack.c.b16 %v341, %v340
    %358 = vmatprep.subr.bf16.mxu0 0
    %359 = vmatpush1.bf16.msra.mxu0 %v342
    %360 = vmatprep.subr.bf16.mxu0 0
    %361 = vmatpush1.bf16.msra.mxu0 %v343
    %362 = vmatprep.subr.bf16.mxu0 0
    %363 = vmatpush1.bf16.msra.mxu0 %v344
    %364 = vmatprep.subr.bf16.mxu0 0
    %365 = vmatpush1.bf16.msra.mxu0 %v345
    %366 = vmatprep.subr.bf16.mxu0 0
    %367 = vmatpush1.bf16.msra.mxu0 %v346
    %368 = vmatprep.subr.bf16.mxu0 0
    %369 = vmatpush1.bf16.msra.mxu0 %v347
    %370 = vmatprep.subr.bf16.mxu0 0
    %371 = vmatpush1.bf16.msra.mxu0 %v348
    %372 = vmatprep.subr.bf16.mxu0 0
    %373 = vmatpush1.bf16.msra.mxu0 %v349
    %374 = vmatprep.subr.bf16.mxu0 0
    %375 = vmatpush1.bf16.msra.mxu0 0
    %376 = vmatprep.subr.bf16.mxu0 0
    %377 = vmatpush1.bf16.msra.mxu0 0
    %378 = vmatprep.subr.bf16.mxu0 0
    %379 = vmatpush1.bf16.msra.mxu0 0
    %380 = vmatprep.subr.bf16.mxu0 0
    %381 = vmatpush1.bf16.msra.mxu0 0
    %382 = vmatprep.subr.bf16.mxu0 0
    %383 = vmatpush1.bf16.msra.mxu0 0
    %384 = vmatprep.subr.bf16.mxu0 0
    %385 = vmatpush1.bf16.msra.mxu0 0
    %386 = vmatprep.subr.bf16.mxu0 0
    %387 = vmatpush1.bf16.msra.mxu0 0
    %388 = vmatprep.subr.bf16.mxu0 0
    %389 = vmatpush1.bf16.msra.mxu0 0
    %390 = vmatprep.mubr.bf16.mxu0 0
    %391 = vmatmul.mubr.bf16.gmra.mrb[0].mxu0 %v286
    %v392 = vpop.f32.mrb[0].mxu0
    %v393 = vadd.f32 %v308, %v392
    %v394 = vpop.f32.mrb[0].mxu0
    %v395 = vpop.f32.mrb[0].mxu0
    %v396 = vadd.f32 %v308, %v395
    %v397 = vpop.f32.mrb[0].mxu0
    %398 = vdwg.mxu0
    %v399 = vmax.f32 %v393, 0.0
    %v400 = vmax.f32 %v396, 0.0
    %v401 = vpack.c.bf16 %v400, %v399
    %v402 = vld [vmem:[#allocation10] sm:$0xf]
    %v403 = vld [vmem:[#allocation10 + $0x4] sm:$0xf]
    %v404 = vld [vmem:[#allocation10 + $0x8] sm:$0xf]
    %v405 = vld [vmem:[#allocation10 + $0xc] sm:$0xf]
    %v406 = vld [vmem:[#allocation10 + $0x10] sm:$0xf]
    %v407 = vld [vmem:[#allocation10 + $0x14] sm:$0xf]
    %v408 = vld [vmem:[#allocation10 + $0x18] sm:$0xf]
    %v409 = vld [vmem:[#allocation10 + $0x1c] sm:$0xf]
    %v410 = vld [vmem:[#allocation10 + $0x20] sm:$0xf]
    %v411 = vld [vmem:[#allocation10 + $0x24] sm:$0xf]
    %v412 = vld [vmem:[#allocation10 + $0x28] sm:$0xf]
    %v413 = vld [vmem:[#allocation10 + $0x2c] sm:$0xf]
    %v414 = vld [vmem:[#allocation10 + $0x30] sm:$0xf]
    %v415 = vld [vmem:[#allocation10 + $0x34] sm:$0xf]
    %v416 = vld [vmem:[#allocation10 + $0x38] sm:$0xf]
    %v417 = vld [vmem:[#allocation10 + $0x3c] sm:$0xf]
    %v418 = vld [vmem:[%s8] sm:$0x1]
    %v420 = vlaneseq
    %v421 = vshrl.u32 %v420, 7
    %v422 = vsub.s32 0, %v421
    %v423 = vrot.slane %v418, %v422
    %v441 = vunpack.c.l.b16 %v402
    %v442 = vunpack.c.l.b16 %v403
    %v443 = vunpack.c.l.b16 %v404
    %v444 = vunpack.c.l.b16 %v405
    %v445 = vunpack.c.l.b16 %v406
    %v446 = vunpack.c.l.b16 %v407
    %v447 = vunpack.c.l.b16 %v408
    %v448 = vunpack.c.l.b16 %v409
    %v449 = vunpack.c.l.b16 %v410
    %v450 = vunpack.c.l.b16 %v411
    %v451 = vunpack.c.l.b16 %v412
    %v452 = vunpack.c.l.b16 %v413
    %v453 = vunpack.c.l.b16 %v414
    %v454 = vunpack.c.l.b16 %v415
    %v455 = vunpack.c.l.b16 %v416
    %v456 = vunpack.c.l.b16 %v417
    %v457 = vpack.c.b16 %v442, %v441
    %v458 = vpack.c.b16 %v444, %v443
    %v459 = vpack.c.b16 %v446, %v445
    %v460 = vpack.c.b16 %v448, %v447
    %v461 = vpack.c.b16 %v450, %v449
    %v462 = vpack.c.b16 %v452, %v451
    %v463 = vpack.c.b16 %v454, %v453
    %v464 = vpack.c.b16 %v456, %v455
    %473 = vmatprep.subr.bf16.mxu0 0
    %474 = vmatpush1.bf16.msra.mxu0 %v457
    %475 = vmatprep.subr.bf16.mxu0 0
    %476 = vmatpush1.bf16.msra.mxu0 %v458
    %477 = vmatprep.subr.bf16.mxu0 0
    %478 = vmatpush1.bf16.msra.mxu0 %v459
    %479 = vmatprep.subr.bf16.mxu0 0
    %480 = vmatpush1.bf16.msra.mxu0 %v460
    %481 = vmatprep.subr.bf16.mxu0 0
    %482 = vmatpush1.bf16.msra.mxu0 %v461
    %483 = vmatprep.subr.bf16.mxu0 0
    %484 = vmatpush1.bf16.msra.mxu0 %v462
    %485 = vmatprep.subr.bf16.mxu0 0
    %486 = vmatpush1.bf16.msra.mxu0 %v463
    %487 = vmatprep.subr.bf16.mxu0 0
    %488 = vmatpush1.bf16.msra.mxu0 %v464
    %489 = vmatprep.subr.bf16.mxu0 0
    %490 = vmatpush1.bf16.msra.mxu0 0
    %491 = vmatprep.subr.bf16.mxu0 0
    %492 = vmatpush1.bf16.msra.mxu0 0
    %493 = vmatprep.subr.bf16.mxu0 0
    %494 = vmatpush1.bf16.msra.mxu0 0
    %495 = vmatprep.subr.bf16.mxu0 0
    %496 = vmatpush1.bf16.msra.mxu0 0
    %497 = vmatprep.subr.bf16.mxu0 0
    %498 = vmatpush1.bf16.msra.mxu0 0
    %499 = vmatprep.subr.bf16.mxu0 0
    %500 = vmatpush1.bf16.msra.mxu0 0
    %501 = vmatprep.subr.bf16.mxu0 0
    %502 = vmatpush1.bf16.msra.mxu0 0
    %503 = vmatprep.subr.bf16.mxu0 0
    %504 = vmatpush1.bf16.msra.mxu0 0
    %505 = vmatprep.mubr.bf16.mxu0 0
    %506 = vmatmul.mubr.bf16.gmra.mrb[0].mxu0 %v401
    %v507 = vpop.f32.mrb[0].mxu0
    %v508 = vadd.f32 %v423, %v507
    %v509 = vpop.f32.mrb[0].mxu0
    %v510 = vpop.f32.mrb[0].mxu0
    %v511 = vadd.f32 %v423, %v510
    %v512 = vpop.f32.mrb[0].mxu0
    %513 = vdwg.mxu0
    %514 = vst [vmem:[#allocation11] sm:$0xff] %v508
    %515 = vst [vmem:[#allocation11 + $0x8] sm:$0xff] %v511
    // Predicated region
    $region58: #{tpu_custom_call.1} parent=1 // pred_check
      _
    $region59: #{tpu_custom_call.1} parent=1 // pred_check_branch
      %517 = sbr.rel (0) target = $region61
    $region60: #{tpu_custom_call.1} parent=1 // pred_region
      %s519 = ssub.s32 256, 256
      %520 = vsyncadd [#allocation4], %s519
      %s521 = sshll.u32 [#allocation11], 4
      %s522 = int_to_ptr.vmem [resolvable:$true] %s521
      %527 = dma.vmem_to_hbm [thread:$0]  %s522, 256, %s9, [#allocation4], 128, 128, 8
    $region61: #{tpu_custom_call.1} parent=1 // pred_fallthru
      _
    // Predicated region
    $region62: #{tpu_custom_call.1} parent=1 // pred_check
      _
    $region63: #{tpu_custom_call.1} parent=1 // pred_check_branch
      %529 = sbr.rel (0) target = $region65
    $region64: #{tpu_custom_call.1} parent=1 // pred_region
      %530 = dma.done [#allocation4], 256
    $region65: #{tpu_custom_call.1} parent=1 // pred_fallthru
      _
    %531 = vsyncpa [#allocation3], 1
    %532 = vsyncpa [#allocation6], 1
    %533 = vsyncpa [#allocation9], 1
    %534 = vsyncpa [#allocation4], 1

</llo_original>
